<compile_context>
chip_gen: v6e
topology: v6e:2x2x1
jax: 0.10.0
libtpu: 0.0.40
codegen_flags: <defaults>
</compile_context>

<pallas_src>
from functools import partial

import jax
import jax.numpy as jnp
from jax.experimental import pallas as pl
from jax.experimental.pallas import tpu as pltpu


def _liquid_linear_kernel(x_ref, w_ref, b_ref, o_ref):
    # x_ref : [1, TS, in_f]   bf16   (this batch element, this seq tile)
    # w_ref : [1, in_f, TN]   bf16   (fused base+adapt weight, [K, N] layout)
    # b_ref : [1, TN]         f32    (base bias tile)
    # o_ref : [1, TS, TN]
    y = jnp.dot(x_ref[0], w_ref[0], preferred_element_type=jnp.float32)  # MXU
    o_ref[0] = (y + b_ref[...]).astype(o_ref.dtype)


def _pick_tile(dim, target, align):
    """Largest tile <= target that divides `dim` and is a multiple of `align`,
    falling back to the full dimension (always a legal block extent)."""
    t = min(target, dim)
    t -= t % align
    while t >= align:
        if dim % t == 0:
            return t
        t -= align
    return dim


@partial(jax.jit, static_argnames=("block_s", "block_out"))
def liquid_linear(x, adapt_input, base_w, base_b, adapt_w, adapt_b,
                  *, block_s=512, block_out=512):
    """
    x:           [B, S, in_f]
    adapt_input: [B, adapt_dim]
    base_w:      [out_f, in_f]          (torch nn.Linear convention)
    base_b:      [out_f]
    adapt_w:     [out_f*in_f, adapt_dim]
    adapt_b:     [out_f*in_f]
    returns:     [B, S, out_f]
    """
    B, S, in_f = x.shape
    out_f = base_w.shape[0]
    adapt_dim = adapt_input.shape[1]

    # ---- one-time parameter permutations (weight-side only) ----------------
    # adapt_linear.weight [out*in, adapt] -> [adapt, in*out] so the batched GEMM
    # below directly produces adapt weights in [B, in_f, out_f] layout.
    wa_t = jnp.transpose(adapt_w.reshape(out_f, in_f, adapt_dim), (2, 1, 0))
    wa_t = wa_t.reshape(adapt_dim, in_f * out_f)
    ba_t = adapt_b.reshape(out_f, in_f).T.reshape(1, in_f * out_f)
    wb_t = base_w.T                                   # [in_f, out_f]
    bb = base_b.reshape(1, out_f)                     # [1, out_f]

    # ---- hoisted adapt-weight generation + base-weight fusion (XLA stage) --
    # One big GEMM; the add + cast fuse into its epilogue, so the per-batch
    # weight hits HBM exactly once, already fused, in bf16, in [K, N] layout.
    aw = jnp.dot(adapt_input, wa_t, preferred_element_type=jnp.float32) + ba_t
    w_fused = (aw.reshape(B, in_f, out_f) + wb_t[None]).astype(jnp.bfloat16)

    # ---- bf16 activations for the MXU (f32 accumulation in-kernel) ---------
    x_bf16 = x.astype(jnp.bfloat16)

    # ---- tiling -------------------------------------------------------------
    ts = _pick_tile(S, block_s, 8)
    tn = _pick_tile(out_f, block_out, 128)
    # S-tile axis innermost: the fused-weight block index (b, n) is constant
    # across consecutive grid steps, so Pallas skips its re-DMA.
    grid = (B, out_f // tn, S // ts)

    # Per-step VMEM working set (single buffer); Pallas double-buffers inputs.
    tile_bytes = (ts * in_f * 2          # x tile (bf16)
                  + in_f * tn * 2        # fused weight tile (bf16)
                  + tn * 4               # bias tile
                  + ts * tn * 4)         # output tile (f32)
    vmem_limit = min(64 << 20, max(32 << 20, int(2.5 * tile_bytes) + (4 << 20)))

    cost = pl.CostEstimate(
        flops=2 * B * S * in_f * out_f,
        transcendentals=0,
        bytes_accessed=(B * S * in_f * 2            # x (bf16)
                        + B * in_f * out_f * 2      # fused weights (bf16)
                        + out_f * 4                 # bias
                        + B * S * out_f * 4),       # output (f32)
    )

    grid_spec = pltpu.PrefetchScalarGridSpec(
        num_scalar_prefetch=0,
        grid=grid,
        in_specs=[
            pl.BlockSpec((1, ts, in_f), lambda b, ni, si: (b, si, 0)),   # x
            pl.BlockSpec((1, in_f, tn), lambda b, ni, si: (b, 0, ni)),   # fused W
            pl.BlockSpec((1, tn), lambda b, ni, si: (0, ni)),            # bias
        ],
        out_specs=pl.BlockSpec((1, ts, tn), lambda b, ni, si: (b, si, ni)),
    )

    return pl.pallas_call(
        _liquid_linear_kernel,
        out_shape=jax.ShapeDtypeStruct((B, S, out_f), x.dtype),
        grid_spec=grid_spec,
        compiler_params=pltpu.CompilerParams(
            dimension_semantics=("parallel", "parallel", "parallel"),
            vmem_limit_bytes=vmem_limit,
        ),
        cost_estimate=cost,
    )(x_bf16, w_fused, bb)


def _xavier_uniform(key, shape):
    # matches torch.nn.init.xavier_uniform_ for a 2-D weight [fan_out, fan_in]
    fan_out, fan_in = shape
    bound = (6.0 / (fan_in + fan_out)) ** 0.5
    return jax.random.uniform(key, shape, jnp.float32, -bound, bound)


def _reference(x, adapt_input, base_w, base_b, adapt_w, adapt_b):
    B = x.shape[0]
    out_f, in_f = base_w.shape
    aw = adapt_input @ adapt_w.T + adapt_b              # [B, out*in]
    aw = aw.reshape(B, out_f, in_f)
    w = base_w[None] + aw                               # [B, out, in]
    y = jnp.einsum('bsi,boi->bso', x, w) + base_b[None, None]
    return y


if __name__ == "__main__":
    # Small but lane-friendly shapes: out_f multiple of 128 keeps stores dense,
    # and block_s/block_out = 128 exercises the (B, N-tile, S-tile) grid.
    B, S = 2, 256
    in_features, out_features, adapt_dim = 128, 256, 32

    key = jax.random.PRNGKey(0)
    k_x, k_a, k_bw, k_aw = jax.random.split(key, 4)

    x = jax.random.normal(k_x, (B, S, in_features), jnp.float32)
    adapt_input = jax.random.normal(k_a, (B, adapt_dim), jnp.float32)

    # Deterministic parameter init mirroring initialize_weights():
    #   xavier_uniform weights, zero biases.
    base_w = _xavier_uniform(k_bw, (out_features, in_features))
    base_b = jnp.zeros((out_features,), jnp.float32)
    adapt_w = _xavier_uniform(k_aw, (out_features * in_features, adapt_dim))
    adapt_b = jnp.zeros((out_features * in_features,), jnp.float32)

    out = liquid_linear(x, adapt_input, base_w, base_b, adapt_w, adapt_b,
                        block_s=128, block_out=128)
    out = jax.block_until_ready(out)

    ref = _reference(x, adapt_input, base_w, base_b, adapt_w, adapt_b)
    assert out.shape == (B, S, out_features)
    # bf16 MXU path with f32 accumulation vs f32 reference -> loosened tolerance.
    assert jnp.allclose(out, ref, atol=1e-1, rtol=5e-2), (
        float(jnp.max(jnp.abs(out - ref))))

    print("KERNEL_OK")
</pallas_src>

<mosaic_0001>
module attributes {stable_mosaic.version = 11 : i64} {
  func.func @_liquid_linear_kernel(%arg0: i32, %arg1: i32, %arg2: i32, %arg3: memref<1x128x128xbf16, #tpu.memory_space<vmem>>, %arg4: memref<1x128x128xbf16, #tpu.memory_space<vmem>>, %arg5: memref<1x128xf32, #tpu.memory_space<vmem>>, %arg6: memref<1x128x128xf32, #tpu.memory_space<vmem>>) attributes {dimension_semantics = [#tpu.dimension_semantics<parallel>, #tpu.dimension_semantics<parallel>, #tpu.dimension_semantics<parallel>], iteration_bounds = array<i64: 2, 2, 2>, scalar_prefetch = 0 : i64, scratch_operands = 0 : i64, tpu.core_type = #tpu.core_type<tc>, window_params = [{transform_indices = @transform_0, window_bounds = array<i64: 1, 128, 128>}, {transform_indices = @transform_1, window_bounds = array<i64: 1, 128, 128>}, {transform_indices = @transform_2, window_bounds = array<i64: 1, 128>}, {transform_indices = @transform_3, window_bounds = array<i64: 1, 128, 128>}]} {
    %c0 = arith.constant 0 : index
    %c0_0 = arith.constant 0 : index
    %c0_1 = arith.constant 0 : index
    %0 = vector.load %arg3[%c0, %c0_0, %c0_1] : memref<1x128x128xbf16, #tpu.memory_space<vmem>>, vector<1x128x128xbf16>
    %1 = vector.shape_cast %0 : vector<1x128x128xbf16> to vector<128x128xbf16>
    %c0_2 = arith.constant 0 : index
    %c0_3 = arith.constant 0 : index
    %c0_4 = arith.constant 0 : index
    %2 = vector.load %arg4[%c0_2, %c0_3, %c0_4] : memref<1x128x128xbf16, #tpu.memory_space<vmem>>, vector<1x128x128xbf16>
    %3 = vector.shape_cast %2 : vector<1x128x128xbf16> to vector<128x128xbf16>
    %cst = arith.constant dense<0.000000e+00> : vector<128x128xf32>
    %4 = tpu.matmul %1, %3, %cst {dimension_numbers = #tpu.dot_dimension_numbers<[1], [0], [0], [1], [0, 0, 1, 1], [], []>} : vector<128x128xbf16>, vector<128x128xbf16>, vector<128x128xf32> -> vector<128x128xf32>
    %c0_5 = arith.constant 0 : index
    %c0_6 = arith.constant 0 : index
    %5 = vector.load %arg5[%c0_5, %c0_6] : memref<1x128xf32, #tpu.memory_space<vmem>>, vector<1x128xf32>
    %6 = vector.broadcast %5 : vector<1x128xf32> to vector<128x128xf32>
    %7 = arith.addf %4, %6 : vector<128x128xf32>
    %c0_7 = arith.constant 0 : index
    %c0_8 = arith.constant 0 : index
    %c0_9 = arith.constant 0 : index
    %8 = vector.load %arg6[%c0_7, %c0_8, %c0_9] : memref<1x128x128xf32, #tpu.memory_space<vmem>>, vector<1x128x128xf32>
    %9 = vector.shape_cast %8 : vector<1x128x128xf32> to vector<128x128xf32>
    %10 = vector.shape_cast %7 : vector<128x128xf32> to vector<1x128x128xf32>
    tpu.vector_store %arg6[%c0_7, %c0_8, %c0_9], %10 {strides = array<i32>} : memref<1x128x128xf32, #tpu.memory_space<vmem>>, vector<1x128x128xf32>,
    return
  }
  func.func @transform_0(%arg0: i32, %arg1: i32, %arg2: i32) -> (i32, i32, i32) {
    %c0_i32 = arith.constant 0 : i32
    %c0_i32_0 = arith.constant 0 : i32
    return %arg0, %arg2, %c0_i32 : i32, i32, i32
  }
  func.func @transform_1(%arg0: i32, %arg1: i32, %arg2: i32) -> (i32, i32, i32) {
    %c0_i32 = arith.constant 0 : i32
    %c0_i32_0 = arith.constant 0 : i32
    return %arg0, %c0_i32, %arg1 : i32, i32, i32
  }
  func.func @transform_2(%arg0: i32, %arg1: i32, %arg2: i32) -> (i32, i32) {
    %c0_i32 = arith.constant 0 : i32
    %c0_i32_0 = arith.constant 0 : i32
    return %c0_i32, %arg1 : i32, i32
  }
  func.func @transform_3(%arg0: i32, %arg1: i32, %arg2: i32) -> (i32, i32, i32) {
    %c0_i32 = arith.constant 0 : i32
    return %arg0, %arg2, %arg1 : i32, i32, i32
  }
}

</mosaic_0001>

<llo_original>
// kernel: liquid_linear.1
$region0: #{liquid_linear.1}
  #allocation0 [shape = 'u32[]', space=smem, size = 0x4, offset = 0x4, fixed_abs, tag = 'smem constant byte address 0x4 - core index']
  #allocation1 [shape = 'u32[144,128]{1,0:T(1,128)}', space=vmem, size = 0x12000, scoped, tag = 'internal scratch']
  %s0 = inlined_call_operand.vmem [shape: bf16[2,256,128], index: 0, kind: input, shape index: {}]
  %s1 = inlined_call_operand.vmem [shape: bf16[2,128,256], index: 1, kind: input, shape index: {}]
  %s2 = inlined_call_operand.vmem [shape: f32[1,256], index: 2, kind: input, shape index: {}]
  %s3 = inlined_call_operand.hbm [shape: f32[2,256,256], index: 3, kind: output, shape index: {}]
  %s4 = sld [smem:[#allocation0]]
  $region86: #{liquid_linear.1} parent=0
    _
  %s6 = ssub.s32 1, %s4
  %s7 = scalar_select 0, %s6, %s4
  $region1: #{liquid_linear.1} parent=0
    #allocation2 [shape = 'u8[65536]{0}', space=vmem, size = 0x10000, scoped, tag = 'input window, operand 1']
    #allocation3 [shape = 'u8[131072]{0}', space=vmem, size = 0x20000, scoped, tag = 'output window, operand 0']
    #allocation4 [shape = 's32[2]{0}', space=sflag, size = 0x8, scoped, tag = 'scoped memory for liquid_linear.1']
    %8 = vsyncpa [#allocation4], 0
    %s9 = scalar_lea.sflag [#allocation4], 1
    %10 = vsyncpa %s9, 0
    loop: start=0, step=1, limit=10
    $region2: #{liquid_linear.1} parent=1 // loop_pre_header
      _
    $region3: #{liquid_linear.1} parent=1 // loop_header
      %s12 = sphi 0, %s16
      %p13 = scmp.ge.s32.totalorder %s12, 10
      %s19 = sphi 0, %s38
      %s20 = sphi 0, %s34
      %s21 = sphi 0, %s30
      %s22 = sphi 0, %s19
      %s23 = sphi 0, %s20
      %s24 = sphi 0, %s21
      %s25 = sphi 0, %s22
      %s26 = sphi 0, %s23
      %s27 = sphi 0, %s24
      %s43 = sphi 0, %s45
      %s46 = sphi 0, %s43
      %s47 = sphi 0, %s46
      %s63 = sphi 0, %s47
      %s71 = sphi 0, %s73
      %s74 = sphi 0, %s71
      %s75 = sphi 0, %s74
      %s91 = sphi 0, %s75
      %s97 = sphi 0, %s99
      %s100 = sphi 0, %s97
      %s101 = sphi 0, %s100
      %s117 = sphi 0, %s101
      %s127 = sphi 0, %s129
      %s130 = sphi 0, %s127
      %s131 = sphi 0, %s130
      %s147 = sphi 0, %s131
    $region4: #{liquid_linear.1} parent=1 // loop_header_branch
      %15 = sbr.rel (%p13) target = $region8
    $region5: #{liquid_linear.1} parent=1 // loop_body
      %s17 = ssub.s32 %s12, 1
      %s18 = ssub.s32 %s12, 2
      %s28 = sadd.s32 1, %s21
      %p29 = scmp.ge.s32.totalorder %s28, 2
      %s30 = scalar_select %p29, 0, %s28
      %s31 = sadd.s32 1, %s20
      %s32 = scalar_select %p29, %s31, %s20
      %p33 = scmp.ge.s32.totalorder %s32, 2
      %s34 = scalar_select %p33, 0, %s32
      %s35 = sadd.s32 1, %s19
      %s36 = scalar_select %p33, %s35, %s19
      %p37 = scmp.ge.s32.totalorder %s36, 2
      %s38 = scalar_select %p37, 0, %s36
      %s39 = ssub.s32 %s19, %s38
      %s40 = ssub.s32 %s21, %s30
      %s41 = sor.u32 %s39, %s40
      %p42 = scmp.eq.s32.totalorder %s41, 0
      %s44 = sadd.s32 %s43, 1
      %s45 = scalar_select %p42, %s43, %s44
      %p48 = pneg %p42
      %p49 = scmp.eq.s32.totalorder %s12, 7
      %p50 = por %p48, %p49
      %p51 = scmp.ne.s32.totalorder %s43, %s46
      %p52 = scmp.eq.s32.totalorder %s12, 0
      %p53 = por %p51, %p52
      %p54 = scmp.ne.s32.totalorder %s43, %s46
      %p55 = scmp.eq.s32.totalorder %s17, 7
      %p56 = por %p54, %p55
      %p57 = scmp.ne.s32.totalorder %s46, %s47
      %p58 = scmp.eq.s32.totalorder %s17, 0
      %p59 = por %p57, %p58
      %p60 = scmp.ne.s32.totalorder %s46, %s47
      %p61 = scmp.eq.s32.totalorder %s18, 7
      %p62 = por %p60, %p61
      %p64 = scmp.ne.s32.totalorder %s47, %s63
      %p65 = scmp.eq.s32.totalorder %s18, 0
      %p66 = por %p64, %p65
      %s67 = ssub.s32 %s19, %s38
      %s68 = ssub.s32 %s20, %s34
      %s69 = sor.u32 %s67, %s68
      %p70 = scmp.eq.s32.totalorder %s69, 0
      %s72 = sadd.s32 %s71, 1
      %s73 = scalar_select %p70, %s71, %s72
      %p76 = pneg %p70
      %p77 = scmp.eq.s32.totalorder %s12, 7
      %p78 = por %p76, %p77
      %p79 = scmp.ne.s32.totalorder %s71, %s74
      %p80 = scmp.eq.s32.totalorder %s12, 0
      %p81 = por %p79, %p80
      %p82 = scmp.ne.s32.totalorder %s71, %s74
      %p83 = scmp.eq.s32.totalorder %s17, 7
      %p84 = por %p82, %p83
      %p85 = scmp.ne.s32.totalorder %s74, %s75
      %p86 = scmp.eq.s32.totalorder %s17, 0
      %p87 = por %p85, %p86
      %p88 = scmp.ne.s32.totalorder %s74, %s75
      %p89 = scmp.eq.s32.totalorder %s18, 7
      %p90 = por %p88, %p89
      %p92 = scmp.ne.s32.totalorder %s75, %s91
      %p93 = scmp.eq.s32.totalorder %s18, 0
      %p94 = por %p92, %p93
      %s95 = ssub.s32 %s20, %s34
      %p96 = scmp.eq.s32.totalorder %s95, 0
      %s98 = sadd.s32 %s97, 1
      %s99 = scalar_select %p96, %s97, %s98
      %p102 = pneg %p96
      %p103 = scmp.eq.s32.totalorder %s12, 7
      %p104 = por %p102, %p103
      %p105 = scmp.ne.s32.totalorder %s97, %s100
      %p106 = scmp.eq.s32.totalorder %s12, 0
      %p107 = por %p105, %p106
      %p108 = scmp.ne.s32.totalorder %s97, %s100
      %p109 = scmp.eq.s32.totalorder %s17, 7
      %p110 = por %p108, %p109
      %p111 = scmp.ne.s32.totalorder %s100, %s101
      %p112 = scmp.eq.s32.totalorder %s17, 0
      %p113 = por %p111, %p112
      %p114 = scmp.ne.s32.totalorder %s100, %s101
      %p115 = scmp.eq.s32.totalorder %s18, 7
      %p116 = por %p114, %p115
      %p118 = scmp.ne.s32.totalorder %s101, %s117
      %p119 = scmp.eq.s32.totalorder %s18, 0
      %p120 = por %p118, %p119
      %s121 = ssub.s32 %s19, %s38
      %s122 = ssub.s32 %s21, %s30
      %s123 = sor.u32 %s121, %s122
      %s124 = ssub.s32 %s20, %s34
      %s125 = sor.u32 %s123, %s124
      %p126 = scmp.eq.s32.totalorder %s125, 0
      %s128 = sadd.s32 %s127, 1
      %s129 = scalar_select %p126, %s127, %s128
      %p132 = pneg %p126
      %p133 = scmp.eq.s32.totalorder %s12, 7
      %p134 = por %p132, %p133
      %p135 = scmp.ne.s32.totalorder %s127, %s130
      %p136 = scmp.eq.s32.totalorder %s12, 0
      %p137 = por %p135, %p136
      %p138 = scmp.ne.s32.totalorder %s127, %s130
      %p139 = scmp.eq.s32.totalorder %s17, 7
      %p140 = por %p138, %p139
      %p141 = scmp.ne.s32.totalorder %s130, %s131
      %p142 = scmp.eq.s32.totalorder %s17, 0
      %p143 = por %p141, %p142
      %p144 = scmp.ne.s32.totalorder %s130, %s131
      %p145 = scmp.eq.s32.totalorder %s18, 7
      %p146 = por %p144, %p145
      %p148 = scmp.ne.s32.totalorder %s131, %s147
      %p149 = scmp.eq.s32.totalorder %s18, 0
      %p150 = por %p148, %p149
      %p151 = scmp.le.s32.totalorder 1, %s12
      %p152 = scmp.lt.s32.totalorder %s12, 9
      %p153 = pnand %p151, %p152
      %p154 = pneg %p153
      // Predicated region
      $region9: #{liquid_linear.1} parent=5 // pred_check
        _
      $region10: #{liquid_linear.1} parent=5 // pred_check_branch
        %156 = sbr.rel (%p153) target = $region12
      $region11: #{liquid_linear.1} parent=5 // pred_region
        %s157 = ssub.s32 %s12, 1
      $region12: #{liquid_linear.1} parent=5 // pred_fallthru
        _
      %p158 = scmp.lt.s32.totalorder %s12, 8
      // Predicated region
      $region13: #{liquid_linear.1} parent=5 // pred_check
        %p159 = pneg %p158
      $region14: #{liquid_linear.1} parent=5 // pred_check_branch
        %161 = sbr.rel (%p159) target = $region16
      $region15: #{liquid_linear.1} parent=5 // pred_region
        // Predicated region
        $region17: #{liquid_linear.1} parent=15 // pred_check
          %p162 = pneg %p53
        $region18: #{liquid_linear.1} parent=15 // pred_check_branch
          %164 = sbr.rel (%p162) target = $region20
        $region19: #{liquid_linear.1} parent=15 // pred_region
          %s165 = smul.u32 16, %s21
          %p166 = scmp.lt.s32.totalorder %s19, 1
          %s167 = scalar_select %p166, %s19, 1
          %p168 = scmp.lt.s32.totalorder %s165, 31
          %s169 = scalar_select %p168, %s165, 31
          %s170 = smul.addr %s167, 32
          %s171 = sadd.s32 %s169, %s170
          %s172 = smul.addr %s171, 4
          %s173 = scalar_lea.vmem %s0, %s172
          %s174 = smul.u32 16, %s21
        $region20: #{liquid_linear.1} parent=15 // pred_fallthru
          _
        // Predicated region
        $region21: #{liquid_linear.1} parent=15 // pred_check
          %p175 = pneg %p81
        $region22: #{liquid_linear.1} parent=15 // pred_check_branch
          %177 = sbr.rel (%p175) target = $region24
        $region23: #{liquid_linear.1} parent=15 // pred_region
          %s178 = sand.u32 %s71, 1
          %s179 = sand.u32 %s71, 1
          %s180 = smul.addr %s179, 64
          %s181 = scalar_lea.vmem [#allocation2], %s180
          %s182 = smul.addr %s19, 32
          %s183 = sadd.s32 %s20, %s182
          %s184 = smul.addr %s183, 4
          %s185 = scalar_lea.vmem %s1, %s184
          // Predicated region
          $region25: #{liquid_linear.1} parent=23 // pred_check
            _
          $region26: #{liquid_linear.1} parent=23 // pred_check_branch
            %187 = sbr.rel (0) target = $region28
          $region27: #{liquid_linear.1} parent=23 // pred_region
            // Predicated region
            $region29: #{liquid_linear.1} parent=27 // pred_check
              _
            $region30: #{liquid_linear.1} parent=27 // pred_check_branch
              %189 = sbr.rel target = $region32
            $region31: #{liquid_linear.1} parent=27 // pred_region
              // Predicated region
              $region44: #{liquid_linear.1} parent=31 // pred_check
                _
              $region45: #{liquid_linear.1} parent=31 // pred_check_branch
                %235 = sbr.rel (0) target = $region47
              $region46: #{liquid_linear.1} parent=31 // pred_region
                loop: start=0, step=1, limit=1
                $region48: #{liquid_linear.1} parent=46 // loop_pre_header
                  _
                $region49: #{liquid_linear.1} parent=46 // loop_header
                  %s237 = sphi 0, %s241
                  %p238 = scmp.ge.s32.totalorder %s237, 1
                  %s242 = sphi %s185, %s185
                  %s243 = sphi %s181, %s181
                $region50: #{liquid_linear.1} parent=46 // loop_header_branch
                  %240 = sbr.rel (%p238) target = $region54
                $region51: #{liquid_linear.1} parent=46 // loop_body
                  _
                $region52: #{liquid_linear.1} parent=46 // loop_footer
                  %s241 = sadd.s32 1, %s237
                $region53: #{liquid_linear.1} parent=46 // loop_footer_branch
                  %236 = sbr.rel target = $region49
                $region54: #{liquid_linear.1} parent=46 // loop_exit
                  _
                %s245 = ssub.s32 16, 1
                loop: start=0, step=1, limit=1
                $region55: #{liquid_linear.1} parent=46 // loop_pre_header
                  _
                $region56: #{liquid_linear.1} parent=46 // loop_header
                  %s247 = sphi 0, %s251
                  %p248 = scmp.ge.s32.totalorder %s247, 1
                  %s252 = sphi %s185, %s185
                  %s253 = sphi %s181, %s181
                $region57: #{liquid_linear.1} parent=46 // loop_header_branch
                  %250 = sbr.rel (%p248) target = $region61
                $region58: #{liquid_linear.1} parent=46 // loop_body
                  %v254 = vld [vmem:[%s252] sm:%s245]
                  %255 = vst [vmem:[%s253] sm:%s245] %v254
                  %v256 = vld [vmem:[%s252 + $0x8] sm:%s245]
                  %257 = vst [vmem:[%s253 + $0x4] sm:%s245] %v256
                  %v258 = vld [vmem:[%s252 + $0x10] sm:%s245]
                  %259 = vst [vmem:[%s253 + $0x8] sm:%s245] %v258
                  %v260 = vld [vmem:[%s252 + $0x18] sm:%s245]
                  %261 = vst [vmem:[%s253 + $0xc] sm:%s245] %v260
                  %v262 = vld [vmem:[%s252 + $0x20] sm:%s245]
                  %263 = vst [vmem:[%s253 + $0x10] sm:%s245] %v262
                  %v264 = vld [vmem:[%s252 + $0x28] sm:%s245]
                  %265 = vst [vmem:[%s253 + $0x14] sm:%s245] %v264
                  %v266 = vld [vmem:[%s252 + $0x30] sm:%s245]
                  %267 = vst [vmem:[%s253 + $0x18] sm:%s245] %v266
                  %v268 = vld [vmem:[%s252 + $0x38] sm:%s245]
                  %269 = vst [vmem:[%s253 + $0x1c] sm:%s245] %v268
                  %v270 = vld [vmem:[%s252 + $0x40] sm:%s245]
                  %271 = vst [vmem:[%s253 + $0x20] sm:%s245] %v270
                  %v272 = vld [vmem:[%s252 + $0x48] sm:%s245]
                  %273 = vst [vmem:[%s253 + $0x24] sm:%s245] %v272
                  %v274 = vld [vmem:[%s252 + $0x50] sm:%s245]
                  %275 = vst [vmem:[%s253 + $0x28] sm:%s245] %v274
                  %v276 = vld [vmem:[%s252 + $0x58] sm:%s245]
                  %277 = vst [vmem:[%s253 + $0x2c] sm:%s245] %v276
                  %v278 = vld [vmem:[%s252 + $0x60] sm:%s245]
                  %279 = vst [vmem:[%s253 + $0x30] sm:%s245] %v278
                  %v280 = vld [vmem:[%s252 + $0x68] sm:%s245]
                  %281 = vst [vmem:[%s253 + $0x34] sm:%s245] %v280
                  %v282 = vld [vmem:[%s252 + $0x70] sm:%s245]
                  %283 = vst [vmem:[%s253 + $0x38] sm:%s245] %v282
                  %v284 = vld [vmem:[%s252 + $0x78] sm:%s245]
                  %285 = vst [vmem:[%s253 + $0x3c] sm:%s245] %v284
                $region59: #{liquid_linear.1} parent=46 // loop_footer
                  %s251 = sadd.s32 1, %s247
                $region60: #{liquid_linear.1} parent=46 // loop_footer_branch
                  %246 = sbr.rel target = $region56
                $region61: #{liquid_linear.1} parent=46 // loop_exit
                  _
              $region47: #{liquid_linear.1} parent=31 // pred_fallthru
                _
            $region32: #{liquid_linear.1} parent=27 // pred_fallthru
              _
            // Predicated region
            $region33: #{liquid_linear.1} parent=27 // pred_check
              _
            $region34: #{liquid_linear.1} parent=27 // pred_check_branch
              %191 = sbr.rel (0) target = $region36
            $region35: #{liquid_linear.1} parent=27 // pred_region
              %s193 = ssub.s32 16, 1
              loop: start=0, step=1, limit=1
              $region37: #{liquid_linear.1} parent=35 // loop_pre_header
                _
              $region38: #{liquid_linear.1} parent=35 // loop_header
                %s195 = sphi 0, %s199
                %p196 = scmp.ge.s32.totalorder %s195, 1
                %s200 = sphi %s185, %s185
                %s201 = sphi %s181, %s181
              $region39: #{liquid_linear.1} parent=35 // loop_header_branch
                %198 = sbr.rel (%p196) target = $region43
              $region40: #{liquid_linear.1} parent=35 // loop_body
                %v202 = vld [vmem:[%s200] sm:%s193]
                %203 = vst [vmem:[%s201] sm:%s193] %v202
                %v204 = vld [vmem:[%s200 + $0x8] sm:%s193]
                %205 = vst [vmem:[%s201 + $0x4] sm:%s193] %v204
                %v206 = vld [vmem:[%s200 + $0x10] sm:%s193]
                %207 = vst [vmem:[%s201 + $0x8] sm:%s193] %v206
                %v208 = vld [vmem:[%s200 + $0x18] sm:%s193]
                %209 = vst [vmem:[%s201 + $0xc] sm:%s193] %v208
                %v210 = vld [vmem:[%s200 + $0x20] sm:%s193]
                %211 = vst [vmem:[%s201 + $0x10] sm:%s193] %v210
                %v212 = vld [vmem:[%s200 + $0x28] sm:%s193]
                %213 = vst [vmem:[%s201 + $0x14] sm:%s193] %v212
                %v214 = vld [vmem:[%s200 + $0x30] sm:%s193]
                %215 = vst [vmem:[%s201 + $0x18] sm:%s193] %v214
                %v216 = vld [vmem:[%s200 + $0x38] sm:%s193]
                %217 = vst [vmem:[%s201 + $0x1c] sm:%s193] %v216
                %v218 = vld [vmem:[%s200 + $0x40] sm:%s193]
                %219 = vst [vmem:[%s201 + $0x20] sm:%s193] %v218
                %v220 = vld [vmem:[%s200 + $0x48] sm:%s193]
                %221 = vst [vmem:[%s201 + $0x24] sm:%s193] %v220
                %v222 = vld [vmem:[%s200 + $0x50] sm:%s193]
                %223 = vst [vmem:[%s201 + $0x28] sm:%s193] %v222
                %v224 = vld [vmem:[%s200 + $0x58] sm:%s193]
                %225 = vst [vmem:[%s201 + $0x2c] sm:%s193] %v224
                %v226 = vld [vmem:[%s200 + $0x60] sm:%s193]
                %227 = vst [vmem:[%s201 + $0x30] sm:%s193] %v226
                %v228 = vld [vmem:[%s200 + $0x68] sm:%s193]
                %229 = vst [vmem:[%s201 + $0x34] sm:%s193] %v228
                %v230 = vld [vmem:[%s200 + $0x70] sm:%s193]
                %231 = vst [vmem:[%s201 + $0x38] sm:%s193] %v230
                %v232 = vld [vmem:[%s200 + $0x78] sm:%s193]
                %233 = vst [vmem:[%s201 + $0x3c] sm:%s193] %v232
              $region41: #{liquid_linear.1} parent=35 // loop_footer
                %s199 = sadd.s32 1, %s195
              $region42: #{liquid_linear.1} parent=35 // loop_footer_branch
                %194 = sbr.rel target = $region38
              $region43: #{liquid_linear.1} parent=35 // loop_exit
                _
            $region36: #{liquid_linear.1} parent=27 // pred_fallthru
              _
          $region28: #{liquid_linear.1} parent=23 // pred_fallthru
            _
          %286 = vnop
        $region24: #{liquid_linear.1} parent=15 // pred_fallthru
          _
        // Predicated region
        $region62: #{liquid_linear.1} parent=15 // pred_check
          %p287 = pneg %p107
        $region63: #{liquid_linear.1} parent=15 // pred_check_branch
          %289 = sbr.rel (%p287) target = $region65
        $region64: #{liquid_linear.1} parent=15 // pred_region
          %p290 = scmp.lt.s32.totalorder %s20, 1
          %s291 = scalar_select %p290, %s20, 1
          %s292 = scalar_lea.vmem %s2, %s291
        $region65: #{liquid_linear.1} parent=15 // pred_fallthru
          _
      $region16: #{liquid_linear.1} parent=5 // pred_fallthru
        _
      %p293 = scmp.le.s32.totalorder 1, %s12
      %p294 = scmp.lt.s32.totalorder %s12, 9
      %p295 = pnand %p293, %p294
      %p296 = pneg %p295
      // Predicated region
      $region66: #{liquid_linear.1} parent=5 // pred_check
        _
      $region67: #{liquid_linear.1} parent=5 // pred_check_branch
        %298 = sbr.rel (%p295) target = $region69
      $region68: #{liquid_linear.1} parent=5 // pred_region
        %s299 = ssub.s32 %s12, 1
        %s300 = sand.u32 %s74, 1
        %s301 = sand.u32 %s74, 1
        %s302 = smul.addr %s301, 64
        %s303 = scalar_lea.vmem [#allocation2], %s302
        // Predicated region
        $region70: #{liquid_linear.1} parent=68 // pred_check
          %p304 = pneg %p87
        $region71: #{liquid_linear.1} parent=68 // pred_check_branch
          %306 = sbr.rel (%p304) target = $region73
        $region72: #{liquid_linear.1} parent=68 // pred_region
          _
        $region73: #{liquid_linear.1} parent=68 // pred_fallthru
          _
        %s307 = smul.u32 16, %s24
        %p308 = scmp.lt.s32.totalorder %s22, 1
        %s309 = scalar_select %p308, %s22, 1
        %p310 = scmp.lt.s32.totalorder %s307, 31
        %s311 = scalar_select %p310, %s307, 31
        %s312 = smul.addr %s309, 32
        %s313 = sadd.s32 %s311, %s312
        %s314 = smul.addr %s313, 4
        %s315 = scalar_lea.vmem %s0, %s314
        %p316 = pneg %p59
        %p317 = pneg %p56
        %s318 = sand.u32 %s74, 1
        %s319 = sand.u32 %s74, 1
        %s320 = smul.addr %s319, 64
        %s321 = scalar_lea.vmem [#allocation2], %s320
        %p322 = pneg %p87
        %p323 = pneg %p84
        %p324 = scmp.lt.s32.totalorder %s23, 1
        %s325 = scalar_select %p324, %s23, 1
        %s326 = scalar_lea.vmem %s2, %s325
        %p327 = pneg %p113
        %p328 = pneg %p110
        %p329 = pneg %p143
        %p330 = pneg %p140
        %s331 = sand.u32 %s130, 1
        %s332 = scalar_lea.sflag [#allocation4], %s331
        %s333 = sand.u32 %s130, 1
        %s334 = smul.addr %s333, 128
        %s335 = scalar_lea.vmem [#allocation3], %s334
        %s336 = smul.u32 16, %s24
        %p337 = scmp.lt.s32.totalorder %s22, 1
        %s338 = scalar_select %p337, %s22, 1
        %p339 = scmp.lt.s32.totalorder %s336, 31
        %s340 = scalar_select %p339, %s336, 31
        %s341 = smul.addr %s338, 32
        %s342 = sadd.s32 %s340, %s341
        %s343 = smul.addr %s342, 4
        %s344 = scalar_lea.vmem %s0, %s343
        %s345 = smul.u32 16, %s24
        %p346 = scmp.lt.s32.totalorder %s23, 1
        %s347 = scalar_select %p346, %s23, 1
        %s348 = scalar_lea.vmem %s2, %s347
        %s349 = smul.u32 16, %s24
        %v351 = vld [vmem:[%s344] sm:$0xf]
        %v352 = vld [vmem:[%s344 + $0x4] sm:$0xf]
        %v353 = vld [vmem:[%s344 + $0x8] sm:$0xf]
        %v354 = vld [vmem:[%s344 + $0xc] sm:$0xf]
        %v355 = vld [vmem:[%s344 + $0x10] sm:$0xf]
        %v356 = vld [vmem:[%s344 + $0x14] sm:$0xf]
        %v357 = vld [vmem:[%s344 + $0x18] sm:$0xf]
        %v358 = vld [vmem:[%s344 + $0x1c] sm:$0xf]
        %v359 = vld [vmem:[%s344 + $0x20] sm:$0xf]
        %v360 = vld [vmem:[%s344 + $0x24] sm:$0xf]
        %v361 = vld [vmem:[%s344 + $0x28] sm:$0xf]
        %v362 = vld [vmem:[%s344 + $0x2c] sm:$0xf]
        %v363 = vld [vmem:[%s344 + $0x30] sm:$0xf]
        %v364 = vld [vmem:[%s344 + $0x34] sm:$0xf]
        %v365 = vld [vmem:[%s344 + $0x38] sm:$0xf]
        %v366 = vld [vmem:[%s344 + $0x3c] sm:$0xf]
        %v367 = vld [vmem:[%s303] sm:$0xf]
        %v368 = vld [vmem:[%s303 + $0x4] sm:$0xf]
        %v369 = vld [vmem:[%s303 + $0x8] sm:$0xf]
        %v370 = vld [vmem:[%s303 + $0xc] sm:$0xf]
        %v371 = vld [vmem:[%s303 + $0x10] sm:$0xf]
        %v372 = vld [vmem:[%s303 + $0x14] sm:$0xf]
        %v373 = vld [vmem:[%s303 + $0x18] sm:$0xf]
        %v374 = vld [vmem:[%s303 + $0x1c] sm:$0xf]
        %v375 = vld [vmem:[%s303 + $0x20] sm:$0xf]
        %v376 = vld [vmem:[%s303 + $0x24] sm:$0xf]
        %v377 = vld [vmem:[%s303 + $0x28] sm:$0xf]
        %v378 = vld [vmem:[%s303 + $0x2c] sm:$0xf]
        %v379 = vld [vmem:[%s303 + $0x30] sm:$0xf]
        %v380 = vld [vmem:[%s303 + $0x34] sm:$0xf]
        %v381 = vld [vmem:[%s303 + $0x38] sm:$0xf]
        %v382 = vld [vmem:[%s303 + $0x3c] sm:$0xf]
        %v383 = vld [vmem:[%s348] sm:$0x1]
        %v385 = vlaneseq
        %v386 = vshrl.u32 %v385, 7
        %v387 = vsub.s32 0, %v386
        %v388 = vrot.slane %v383, %v387
        %v406 = vunpack.c.l.b16 %v351
        %v407 = vunpack.c.l.b16 %v352
        %v408 = vunpack.c.l.b16 %v353
        %v409 = vunpack.c.l.b16 %v354
        %v410 = vunpack.c.l.b16 %v355
        %v411 = vunpack.c.l.b16 %v356
        %v412 = vunpack.c.l.b16 %v357
        %v413 = vunpack.c.l.b16 %v358
        %v414 = vunpack.c.l.b16 %v359
        %v415 = vunpack.c.l.b16 %v360
        %v416 = vunpack.c.l.b16 %v361
        %v417 = vunpack.c.l.b16 %v362
        %v418 = vunpack.c.l.b16 %v363
        %v419 = vunpack.c.l.b16 %v364
        %v420 = vunpack.c.l.b16 %v365
        %v421 = vunpack.c.l.b16 %v366
        %v422 = vpack.c.b16 %v407, %v406
        %v423 = vpack.c.b16 %v409, %v408
        %v424 = vpack.c.b16 %v411, %v410
        %v425 = vpack.c.b16 %v413, %v412
        %v426 = vpack.c.b16 %v415, %v414
        %v427 = vpack.c.b16 %v417, %v416
        %v428 = vpack.c.b16 %v419, %v418
        %v429 = vpack.c.b16 %v421, %v420
        %v454 = vunpack.c.l.b16 %v367
        %v455 = vunpack.c.l.b16 %v368
        %v456 = vunpack.c.l.b16 %v369
        %v457 = vunpack.c.l.b16 %v370
        %v458 = vunpack.c.l.b16 %v371
        %v459 = vunpack.c.l.b16 %v372
        %v460 = vunpack.c.l.b16 %v373
        %v461 = vunpack.c.l.b16 %v374
        %v462 = vunpack.c.l.b16 %v375
        %v463 = vunpack.c.l.b16 %v376
        %v464 = vunpack.c.l.b16 %v377
        %v465 = vunpack.c.l.b16 %v378
        %v466 = vunpack.c.l.b16 %v379
        %v467 = vunpack.c.l.b16 %v380
        %v468 = vunpack.c.l.b16 %v381
        %v469 = vunpack.c.l.b16 %v382
        %v470 = vpack.c.b16 %v455, %v454
        %v471 = vpack.c.b16 %v457, %v456
        %v472 = vpack.c.b16 %v459, %v458
        %v473 = vpack.c.b16 %v461, %v460
        %v474 = vpack.c.b16 %v463, %v462
        %v475 = vpack.c.b16 %v465, %v464
        %v476 = vpack.c.b16 %v467, %v466
        %v477 = vpack.c.b16 %v469, %v468
        %486 = vmatprep.subr.bf16.mxu0 0
        %487 = vmatpush1.bf16.msra.mxu0 %v477
        %488 = vmatprep.subr.bf16.mxu0 0
        %489 = vmatpush1.bf16.msra.mxu0 %v476
        %490 = vmatprep.subr.bf16.mxu0 0
        %491 = vmatpush1.bf16.msra.mxu0 %v475
        %492 = vmatprep.subr.bf16.mxu0 0
        %493 = vmatpush1.bf16.msra.mxu0 %v474
        %494 = vmatprep.subr.bf16.mxu0 0
        %495 = vmatpush1.bf16.msra.mxu0 %v473
        %496 = vmatprep.subr.bf16.mxu0 0
        %497 = vmatpush1.bf16.msra.mxu0 %v472
        %498 = vmatprep.subr.bf16.mxu0 0
        %499 = vmatpush1.bf16.msra.mxu0 %v471
        %500 = vmatprep.subr.bf16.mxu0 0
        %501 = vmatpush1.bf16.msra.mxu0 %v470
        %502 = vmatprep.subr.bf16.mxu0 0
        %503 = vmatpush2.bf16.msra.mxu0 0
        %504 = vmatprep.subr.bf16.mxu0 0
        %505 = vmatpush2.bf16.msra.mxu0 0
        %506 = vmatprep.subr.bf16.mxu0 0
        %507 = vmatpush2.bf16.msra.mxu0 0
        %508 = vmatprep.subr.bf16.mxu0 0
        %509 = vmatpush2.bf16.msra.mxu0 0
        %510 = vmatprep.subr.bf16.mxu0 0
        %511 = vmatpush2.bf16.msra.mxu0 0
        %512 = vmatprep.subr.bf16.mxu0 0
        %513 = vmatpush2.bf16.msra.mxu0 0
        %514 = vmatprep.subr.bf16.mxu0 0
        %515 = vmatpush2.bf16.msra.mxu0 0
        %516 = vmatprep.subr.bf16.mxu0 0
        %517 = vmatpush2.bf16.msra.mxu0 0
        %518 = vmatprep.mubr.bf16.mxu0 0
        %519 = vmatmul.mubr.bf16.gmra.mxu0 %v422
        %v520 = vpop.f32.mrf.mxu0
        %v521 = vadd.f32 %v388, %v520
        %v522 = vpop.f32.mrf.mxu0
        %v523 = vpop.f32.mrf.mxu0
        %v524 = vadd.f32 %v388, %v523
        %v525 = vpop.f32.mrf.mxu0
        %526 = vmatprep.mubr.bf16.mxu0 0
        %527 = vmatmul.mubr.bf16.gmra.mxu0 %v423
        %v528 = vpop.f32.mrf.mxu0
        %v529 = vadd.f32 %v388, %v528
        %v530 = vpop.f32.mrf.mxu0
        %v531 = vpop.f32.mrf.mxu0
        %v532 = vadd.f32 %v388, %v531
        %v533 = vpop.f32.mrf.mxu0
        %534 = vmatprep.mubr.bf16.mxu0 0
        %535 = vmatmul.mubr.bf16.gmra.mxu0 %v424
        %v536 = vpop.f32.mrf.mxu0
        %v537 = vadd.f32 %v388, %v536
        %v538 = vpop.f32.mrf.mxu0
        %v539 = vpop.f32.mrf.mxu0
        %v540 = vadd.f32 %v388, %v539
        %v541 = vpop.f32.mrf.mxu0
        %542 = vmatprep.mubr.bf16.mxu0 0
        %543 = vmatmul.mubr.bf16.gmra.mxu0 %v425
        %v544 = vpop.f32.mrf.mxu0
        %v545 = vadd.f32 %v388, %v544
        %v546 = vpop.f32.mrf.mxu0
        %v547 = vpop.f32.mrf.mxu0
        %v548 = vadd.f32 %v388, %v547
        %v549 = vpop.f32.mrf.mxu0
        %550 = vmatprep.mubr.bf16.mxu0 0
        %551 = vmatmul.mubr.bf16.gmra.mxu0 %v426
        %v552 = vpop.f32.mrf.mxu0
        %v553 = vadd.f32 %v388, %v552
        %v554 = vpop.f32.mrf.mxu0
        %v555 = vpop.f32.mrf.mxu0
        %v556 = vadd.f32 %v388, %v555
        %v557 = vpop.f32.mrf.mxu0
        %558 = vmatprep.mubr.bf16.mxu0 0
        %559 = vmatmul.mubr.bf16.gmra.mxu0 %v427
        %v560 = vpop.f32.mrf.mxu0
        %v561 = vadd.f32 %v388, %v560
        %v562 = vpop.f32.mrf.mxu0
        %v563 = vpop.f32.mrf.mxu0
        %v564 = vadd.f32 %v388, %v563
        %v565 = vpop.f32.mrf.mxu0
        %566 = vmatprep.mubr.bf16.mxu0 0
        %567 = vmatmul.mubr.bf16.gmra.mxu0 %v428
        %v568 = vpop.f32.mrf.mxu0
        %v569 = vadd.f32 %v388, %v568
        %v570 = vpop.f32.mrf.mxu0
        %v571 = vpop.f32.mrf.mxu0
        %v572 = vadd.f32 %v388, %v571
        %v573 = vpop.f32.mrf.mxu0
        %574 = vmatprep.mubr.bf16.mxu0 0
        %575 = vmatmul.mubr.bf16.gmra.mxu0 %v429
        %v576 = vpop.f32.mrf.mxu0
        %v577 = vadd.f32 %v388, %v576
        %v578 = vpop.f32.mrf.mxu0
        %v579 = vpop.f32.mrf.mxu0
        %v580 = vadd.f32 %v388, %v579
        %v581 = vpop.f32.mrf.mxu0
        %582 = vdwg.mxu0
        %583 = vst [vmem:[%s335] sm:$0xff] %v521
        %584 = vst [vmem:[%s335 + $0x8] sm:$0xff] %v524
        %585 = vst [vmem:[%s335 + $0x10] sm:$0xff] %v529
        %586 = vst [vmem:[%s335 + $0x18] sm:$0xff] %v532
        %587 = vst [vmem:[%s335 + $0x20] sm:$0xff] %v537
        %588 = vst [vmem:[%s335 + $0x28] sm:$0xff] %v540
        %589 = vst [vmem:[%s335 + $0x30] sm:$0xff] %v545
        %590 = vst [vmem:[%s335 + $0x38] sm:$0xff] %v548
        %591 = vst [vmem:[%s335 + $0x40] sm:$0xff] %v553
        %592 = vst [vmem:[%s335 + $0x48] sm:$0xff] %v556
        %593 = vst [vmem:[%s335 + $0x50] sm:$0xff] %v561
        %594 = vst [vmem:[%s335 + $0x58] sm:$0xff] %v564
        %595 = vst [vmem:[%s335 + $0x60] sm:$0xff] %v569
        %596 = vst [vmem:[%s335 + $0x68] sm:$0xff] %v572
        %597 = vst [vmem:[%s335 + $0x70] sm:$0xff] %v577
        %598 = vst [vmem:[%s335 + $0x78] sm:$0xff] %v580
        %s599 = sand.u32 %s130, 1
        %s600 = scalar_lea.sflag [#allocation4], %s599
        %s601 = sand.u32 %s130, 1
        %s602 = smul.addr %s601, 128
        %s603 = scalar_lea.vmem [#allocation3], %s602
        // Predicated region
        $region74: #{liquid_linear.1} parent=68 // pred_check
          %p604 = pneg %p140
        $region75: #{liquid_linear.1} parent=68 // pred_check_branch
          %606 = sbr.rel (%p604) target = $region77
        $region76: #{liquid_linear.1} parent=68 // pred_region
          %s607 = smul.u32 16, %s24
          %s609 = ssub.s32 2048, 2048
          %610 = vsyncadd %s600, %s609
          %s611 = smul.addr %s607, 2
          %s612 = sadd.s32 %s23, %s611
          %s613 = smul.addr %s22, 64
          %s614 = sadd.s32 %s612, %s613
          %s615 = smul.addr %s614, 128
          %s616 = scalar_lea.hbm %s3, %s615
          %s617 = sshll.u32 %s603, 4
          %s618 = int_to_ptr.vmem [resolvable:$true] %s617
          %623 = dma.vmem_to_hbm [thread:$0]  %s618, 2048, %s616, %s600, 128, 256, 8
        $region77: #{liquid_linear.1} parent=68 // pred_fallthru
          _
      $region69: #{liquid_linear.1} parent=5 // pred_fallthru
        _
      %p624 = scmp.le.s32.totalorder 2, %s12
      // Predicated region
      $region78: #{liquid_linear.1} parent=5 // pred_check
        %p625 = pneg %p624
      $region79: #{liquid_linear.1} parent=5 // pred_check_branch
        %627 = sbr.rel (%p625) target = $region81
      $region80: #{liquid_linear.1} parent=5 // pred_region
        %s628 = ssub.s32 %s12, 2
        // Predicated region
        $region82: #{liquid_linear.1} parent=80 // pred_check
          %p629 = pneg %p146
        $region83: #{liquid_linear.1} parent=80 // pred_check_branch
          %631 = sbr.rel (%p629) target = $region85
        $region84: #{liquid_linear.1} parent=80 // pred_region
          %s632 = sand.u32 %s131, 1
          %s633 = scalar_lea.sflag [#allocation4], %s632
          %s634 = sand.u32 %s131, 1
          %s635 = smul.addr %s634, 128
          %s636 = scalar_lea.vmem [#allocation3], %s635
          %637 = dma.done %s633, 2048
        $region85: #{liquid_linear.1} parent=80 // pred_fallthru
          _
      $region81: #{liquid_linear.1} parent=5 // pred_fallthru
        _
    $region6: #{liquid_linear.1} parent=1 // loop_footer
      %s16 = sadd.s32 1, %s12
    $region7: #{liquid_linear.1} parent=1 // loop_footer_branch
      %11 = sbr.rel target = $region3
    $region8: #{liquid_linear.1} parent=1 // loop_exit
      _
    %638 = vsyncpa [#allocation4], 1
    %s639 = scalar_lea.sflag [#allocation4], 1
    %640 = vsyncpa %s639, 1

</llo_original>
